<compile_context>
chip_gen: v7x
topology: tpu7x:2x2x1
jax: 0.10.0
libtpu: 0.0.40
codegen_flags: <defaults>
</compile_context>

<pallas_src>
import jax
import jax.numpy as jnp
from jax.experimental import pallas as pl
from jax.experimental.pallas import tpu as pltpu


LEAK = 0.1  # LeakyReLU negative slope


def _round_up(v, m):
    return (v + m - 1) // m * m


# --------------------------------------------------------------------------------------
# Kernel
# --------------------------------------------------------------------------------------
def _a3c_mlp_kernel(
    x_ref,
    w1_ref, b1_ref,
    w2_ref, b2_ref,
    w3_ref, b3_ref,
    w4_ref, b4_ref,
    wh_ref, bh_ref,
    amask_ref,
    out_ref,
):
    f32 = jnp.float32
    cd = w1_ref.dtype  # compute dtype of the matmul operands (bf16 or f32)

    # fc1 .. fc4 with LeakyReLU(0.1).  Matmul operands may be bf16 (all generations'
    # MXUs take bf16); accumulation and elementwise math stay in f32.
    h = jnp.dot(x_ref[...].astype(cd), w1_ref[...], preferred_element_type=f32) + b1_ref[...]
    h = jnp.maximum(h, LEAK * h)

    h = jnp.dot(h.astype(cd), w2_ref[...], preferred_element_type=f32) + b2_ref[...]
    h = jnp.maximum(h, LEAK * h)

    h = jnp.dot(h.astype(cd), w3_ref[...], preferred_element_type=f32) + b3_ref[...]
    h = jnp.maximum(h, LEAK * h)

    h = jnp.dot(h.astype(cd), w4_ref[...], preferred_element_type=f32) + b4_ref[...]
    h = jnp.maximum(h, LEAK * h)

    # Fused heads: one (128, 128) matmul, lane-dense output.
    #   lane 0                       -> critic
    #   lanes 1 .. num_outputs       -> actor (softsign applied here)
    #   lanes 1+no .. 1+2*no         -> actor2 (raw)
    #   remaining lanes              -> zero padding
    head = jnp.dot(h.astype(cd), wh_ref[...], preferred_element_type=f32) + bh_ref[...]

    # softsign(a) = a / (1 + |a|); exact reciprocal so |actor| < 1 is preserved.
    soft = head * pl.reciprocal(1.0 + jnp.abs(head), approx=False)
    m = amask_ref[...]                       # (1, head_pad) f32, 1.0 on actor lanes
    out_ref[...] = head + m * (soft - head)  # = where(actor lane, softsign, raw)


# --------------------------------------------------------------------------------------
# Wrappers
# --------------------------------------------------------------------------------------
def _choose_tile_m(M):
    """Row tile: as large as useful (per-tile compute >> 0.35us step overhead), but keep
    at least 2 grid steps when M allows so v7x's 2 TensorCores both get work."""
    m8 = _round_up(max(M, 1), 8)
    if m8 <= 16:
        return m8
    # cap at 512 rows; VMEM at 512 rows (activation chain + double-buffered x/out) is
    # only a few MiB -- far under the scoped limit on v5e/v6e/v7x.
    return min(512, _round_up(pl.cdiv(m8, 2), 8))


def a3c_mlp_batched(x, packed):
    """Run the A3C_MLP trunk + fused heads on (M, num_inputs) rows.

    Returns (critic (M,1), softsign(actor) (M,no), actor2 (M,no)), all float32.
    The matmul operand dtype is whatever pack_params stored (bf16 by default).
    """
    M, k_in = x.shape
    num_outputs = packed["num_outputs"]
    head_pad = packed["w_head"].shape[1]

    tile_m = _choose_tile_m(M)
    m_pad = _round_up(M, tile_m)
    if m_pad != M:
        # Only the row dim is padded (cheap, ragged-M only); the lane dim stays at
        # num_inputs -- no per-call (m_pad, 128) pad+cast materialization.
        x = jnp.pad(x, ((0, m_pad - M), (0, 0)))

    w1, b1 = packed["w1"], packed["b1"]
    w2, b2 = packed["w2"], packed["b2"]
    w3, b3 = packed["w3"], packed["b3"]
    w4, b4 = packed["w4"], packed["b4"]
    wh, bh = packed["w_head"], packed["b_head"]
    amask = packed["actor_mask"]

    grid = (m_pad // tile_m,)
    row_spec = pl.BlockSpec((tile_m, k_in), lambda i: (i, 0))       # full last dim -> legal
    out_spec = pl.BlockSpec((tile_m, head_pad), lambda i: (i, 0))   # lane-dense (.,128)

    def const_spec(a):
        # Constant block index -> weights/biases/mask are DMA'd once and stay
        # VMEM-resident across all grid steps.
        return pl.BlockSpec(a.shape, lambda i: (0, 0))

    out = pl.pallas_call(
        _a3c_mlp_kernel,
        out_shape=jax.ShapeDtypeStruct((m_pad, head_pad), jnp.float32),
        grid=grid,
        in_specs=[
            row_spec,
            const_spec(w1), const_spec(b1),
            const_spec(w2), const_spec(b2),
            const_spec(w3), const_spec(b3),
            const_spec(w4), const_spec(b4),
            const_spec(wh), const_spec(bh),
            const_spec(amask),
        ],
        out_specs=out_spec,
        compiler_params=pltpu.CompilerParams(
            dimension_semantics=("parallel",)),  # independent row tiles; v7x splits cores
    )(x, w1, b1, w2, b2, w3, b3, w4, b4, wh, bh, amask)

    critic = out[:M, 0:1]
    actor = out[:M, 1:1 + num_outputs]                       # softsign already applied
    actor2 = out[:M, 1 + num_outputs:1 + 2 * num_outputs]
    return critic, actor, actor2


def a3c_mlp_forward(x, hx, cx, packed):
    """Module-faithful forward: returns (critic, softsign(actor), actor2, (hx, cx))."""
    # PyTorch does x.view(1, n_frames*128) before Linear(128, ...): only valid for
    # n_frames == 1.  Make that assumption explicit instead of silently diverging.
    assert x.shape[0] == 1, "A3C_MLP forward requires n_frames == 1 (x.view(1, n_frames*128))"
    critic, actor, actor2 = a3c_mlp_batched(x, packed)
    return critic, actor, actor2, (hx, cx)


# --------------------------------------------------------------------------------------
# Parameter construction
# --------------------------------------------------------------------------------------
def init_params(key, num_inputs, num_outputs):
    """Deterministic synthetic init matching the module's parameter shapes/semantics.

    Weights are stored as (in_features, out_features) -- transpose of PyTorch nn.Linear --
    so the kernel computes y = x @ W + b directly.
    """
    lrelu_gain = (2.0 / (1.0 + 0.01 ** 2)) ** 0.5  # nn.init.calculate_gain('leaky_relu')

    def linear(k, fan_in, fan_out, w_scale):
        kw, kb = jax.random.split(k)
        bound = 1.0 / (fan_in ** 0.5)
        w = jax.random.uniform(kw, (fan_in, fan_out), jnp.float32, -bound, bound) * w_scale
        b = jax.random.uniform(kb, (1, fan_out), jnp.float32, -bound, bound)
        return w, b

    def norm_col(k, fan_in, fan_out, std):
        kw, kb = jax.random.split(k)
        w = jax.random.normal(kw, (fan_in, fan_out), jnp.float32)
        w = w * std / jnp.sqrt(jnp.sum(w * w, axis=0, keepdims=True))  # per-out-unit norm
        b = jax.random.normal(kb, (1, fan_out), jnp.float32) * std
        return w, b

    ks = jax.random.split(key, 7)
    w1, b1 = linear(ks[0], num_inputs, 256, lrelu_gain)
    w2, b2 = linear(ks[1], 256, 256, lrelu_gain)
    w3, b3 = linear(ks[2], 256, 128, lrelu_gain)
    w4, b4 = linear(ks[3], 128, 128, lrelu_gain)
    wc, bc = norm_col(ks[4], 128, 1, 1.0)
    wa, ba = norm_col(ks[5], 128, num_outputs, 0.01)
    wa2, ba2 = norm_col(ks[6], 128, num_outputs, 0.01)
    return (w1, b1, w2, b2, w3, b3, w4, b4, wc, bc, wa, ba, wa2, ba2)


def pack_params(params, dtype=jnp.bfloat16):
    """Fuse the three heads into one lane-dense weight and store weights in the compute
    dtype at pack time (bf16 default: halves weight DMA, avoids MXU f32 emulation).
    Biases stay float32 (they are added onto the f32 accumulator)."""
    (w1, b1, w2, b2, w3, b3, w4, b4, wc, bc, wa, ba, wa2, ba2) = params
    num_outputs = wa.shape[1]

    head_w = 1 + 2 * num_outputs
    head_pad = _round_up(head_w, 128)
    w_head = jnp.zeros((128, head_pad), jnp.float32)
    w_head = (w_head.at[:, 0:1].set(wc)
                    .at[:, 1:1 + num_outputs].set(wa)
                    .at[:, 1 + num_outputs:head_w].set(wa2))
    b_head = jnp.zeros((1, head_pad), jnp.float32)
    b_head = (b_head.at[:, 0:1].set(bc)
                    .at[:, 1:1 + num_outputs].set(ba)
                    .at[:, 1 + num_outputs:head_w].set(ba2))

    # Actor-lane mask baked here so the kernel avoids per-step iota + int compares.
    actor_mask = jnp.zeros((1, head_pad), jnp.float32).at[:, 1:1 + num_outputs].set(1.0)

    return {
        "w1": w1.astype(dtype), "b1": b1,
        "w2": w2.astype(dtype), "b2": b2,
        "w3": w3.astype(dtype), "b3": b3,
        "w4": w4.astype(dtype), "b4": b4,
        "w_head": w_head.astype(dtype), "b_head": b_head,
        "actor_mask": actor_mask,
        "num_outputs": num_outputs,
    }


# --------------------------------------------------------------------------------------
# Pure-JAX reference (for correctness checks)
# --------------------------------------------------------------------------------------
def a3c_mlp_reference(x, params):
    (w1, b1, w2, b2, w3, b3, w4, b4, wc, bc, wa, ba, wa2, ba2) = params

    def lrelu(v):
        return jnp.maximum(v, LEAK * v)

    h = lrelu(x @ w1 + b1)
    h = lrelu(h @ w2 + b2)
    h = lrelu(h @ w3 + b3)
    h = lrelu(h @ w4 + b4)
    critic = h @ wc + bc
    actor = h @ wa + ba
    actor = actor / (1.0 + jnp.abs(actor))
    actor2 = h @ wa2 + ba2
    return critic, actor, actor2


# --------------------------------------------------------------------------------------
# Demo / smoke test
# --------------------------------------------------------------------------------------
if __name__ == "__main__":
    key = jax.random.PRNGKey(0)
    k_x, k_h, k_c, k_p, k_b = jax.random.split(key, 5)

    num_inputs = 32
    num_outputs = 4   # action_space.shape[0]
    n_frames = 1      # required by x.view(1, n_frames*128) feeding Linear(128, ...)

    raw_params = init_params(k_p, num_inputs, num_outputs)

    # ---- Module-faithful forward (n_frames == 1), f32 params, tight reference check.
    x = jax.random.normal(k_x, (n_frames, num_inputs), jnp.float32)
    hx = jax.random.normal(k_h, (1, 128), jnp.float32)
    cx = jax.random.normal(k_c, (1, 128), jnp.float32)

    packed_f32 = pack_params(raw_params, dtype=jnp.float32)
    critic, actor, actor2, (hx_out, cx_out) = a3c_mlp_forward(x, hx, cx, packed_f32)
    jax.block_until_ready((critic, actor, actor2, hx_out, cx_out))

    c_ref, a_ref, a2_ref = a3c_mlp_reference(x, raw_params)
    assert critic.shape == (1, 1)
    assert actor.shape == (1, num_outputs)
    assert actor2.shape == (1, num_outputs)
    assert bool(jnp.allclose(critic, c_ref, atol=1e-4, rtol=1e-4))
    assert bool(jnp.allclose(actor, a_ref, atol=1e-4, rtol=1e-4))
    assert bool(jnp.allclose(actor2, a2_ref, atol=1e-4, rtol=1e-4))
    assert bool(jnp.all(jnp.abs(actor) < 1.0))   # softsign range check
    assert hx_out is hx and cx_out is cx          # pass-through state

    # ---- Batched path (rows = environments/timesteps), bf16 operands by default.
    # M=1024 -> tile_m=512, grid of 2 "parallel" steps (both v7x TensorCores busy);
    # weight DMA is amortized across the grid and each MXU push presents full granules.
    packed_bf16 = pack_params(raw_params)                 # bf16 stored at pack time
    x_batch = jax.random.normal(k_b, (1024, num_inputs), jnp.float32)
    c_b, a_b, a2_b = a3c_mlp_batched(x_batch, packed_bf16)
    jax.block_until_ready((c_b, a_b, a2_b))

    c_rb, a_rb, a2_rb = a3c_mlp_reference(x_batch, raw_params)
    assert c_b.shape == (1024, 1)
    assert a_b.shape == (1024, num_outputs)
    assert a2_b.shape == (1024, num_outputs)
    # bf16 operand / re-quantized-activation drift vs the f32 reference (documented):
    assert bool(jnp.allclose(c_b, c_rb, atol=2e-1, rtol=1e-1))
    assert bool(jnp.allclose(a_b, a_rb, atol=3e-2, rtol=1e-1))
    assert bool(jnp.allclose(a2_b, a2_rb, atol=3e-2, rtol=1e-1))
    assert bool(jnp.all(jnp.abs(a_b) < 1.0))
    assert bool(jnp.all(jnp.isfinite(c_b)))

    print("KERNEL_OK")
</pallas_src>

<mosaic_0001>
module attributes {stable_mosaic.version = 11 : i64} {
  func.func @_a3c_mlp_kernel(%arg0: i32, %arg1: memref<8x32xf32, #tpu.memory_space<vmem>>, %arg2: memref<32x256xf32, #tpu.memory_space<vmem>>, %arg3: memref<1x256xf32, #tpu.memory_space<vmem>>, %arg4: memref<256x256xf32, #tpu.memory_space<vmem>>, %arg5: memref<1x256xf32, #tpu.memory_space<vmem>>, %arg6: memref<256x128xf32, #tpu.memory_space<vmem>>, %arg7: memref<1x128xf32, #tpu.memory_space<vmem>>, %arg8: memref<128x128xf32, #tpu.memory_space<vmem>>, %arg9: memref<1x128xf32, #tpu.memory_space<vmem>>, %arg10: memref<128x128xf32, #tpu.memory_space<vmem>>, %arg11: memref<1x128xf32, #tpu.memory_space<vmem>>, %arg12: memref<1x128xf32, #tpu.memory_space<vmem>>, %arg13: memref<8x128xf32, #tpu.memory_space<vmem>>) attributes {dimension_semantics = [#tpu.dimension_semantics<parallel>], iteration_bounds = array<i64: 1>, scalar_prefetch = 0 : i64, scratch_operands = 0 : i64, tpu.core_type = #tpu.core_type<tc>, window_params = [{transform_indices = @transform_0, window_bounds = array<i64: 8, 32>}, {pipeline_mode = #tpu.pipeline_mode<synchronous>, transform_indices = @transform_1, window_bounds = array<i64: 32, 256>}, {pipeline_mode = #tpu.pipeline_mode<synchronous>, transform_indices = @transform_2, window_bounds = array<i64: 1, 256>}, {pipeline_mode = #tpu.pipeline_mode<synchronous>, transform_indices = @transform_3, window_bounds = array<i64: 256, 256>}, {pipeline_mode = #tpu.pipeline_mode<synchronous>, transform_indices = @transform_4, window_bounds = array<i64: 1, 256>}, {pipeline_mode = #tpu.pipeline_mode<synchronous>, transform_indices = @transform_5, window_bounds = array<i64: 256, 128>}, {pipeline_mode = #tpu.pipeline_mode<synchronous>, transform_indices = @transform_6, window_bounds = array<i64: 1, 128>}, {pipeline_mode = #tpu.pipeline_mode<synchronous>, transform_indices = @transform_7, window_bounds = array<i64: 128, 128>}, {pipeline_mode = #tpu.pipeline_mode<synchronous>, transform_indices = @transform_8, window_bounds = array<i64: 1, 128>}, {pipeline_mode = #tpu.pipeline_mode<synchronous>, transform_indices = @transform_9, window_bounds = array<i64: 128, 128>}, {pipeline_mode = #tpu.pipeline_mode<synchronous>, transform_indices = @transform_10, window_bounds = array<i64: 1, 128>}, {pipeline_mode = #tpu.pipeline_mode<synchronous>, transform_indices = @transform_11, window_bounds = array<i64: 1, 128>}, {transform_indices = @transform_12, window_bounds = array<i64: 8, 128>}]} {
    %c0 = arith.constant 0 : index
    %c0_0 = arith.constant 0 : index
    %0 = vector.load %arg1[%c0, %c0_0] : memref<8x32xf32, #tpu.memory_space<vmem>>, vector<8x32xf32>
    %c0_1 = arith.constant 0 : index
    %c0_2 = arith.constant 0 : index
    %1 = vector.load %arg2[%c0_1, %c0_2] : memref<32x256xf32, #tpu.memory_space<vmem>>, vector<32x256xf32>
    %cst = arith.constant dense<0.000000e+00> : vector<8x256xf32>
    %2 = tpu.matmul %0, %1, %cst {dimension_numbers = #tpu.dot_dimension_numbers<[1], [0], [0], [1], [0, 0, 1, 1], [], []>} : vector<8x32xf32>, vector<32x256xf32>, vector<8x256xf32> -> vector<8x256xf32>
    %c0_3 = arith.constant 0 : index
    %c0_4 = arith.constant 0 : index
    %3 = vector.load %arg3[%c0_3, %c0_4] : memref<1x256xf32, #tpu.memory_space<vmem>>, vector<1x256xf32>
    %4 = vector.broadcast %3 : vector<1x256xf32> to vector<8x256xf32>
    %5 = arith.addf %2, %4 : vector<8x256xf32>
    %cst_5 = arith.constant 1.000000e-01 : f32
    %6 = vector.broadcast %cst_5 : f32 to vector<8x256xf32>
    %7 = arith.mulf %6, %5 : vector<8x256xf32>
    %8 = arith.maximumf %5, %7 : vector<8x256xf32>
    %c0_6 = arith.constant 0 : index
    %c0_7 = arith.constant 0 : index
    %9 = vector.load %arg4[%c0_6, %c0_7] : memref<256x256xf32, #tpu.memory_space<vmem>>, vector<256x256xf32>
    %cst_8 = arith.constant dense<0.000000e+00> : vector<8x256xf32>
    %10 = tpu.matmul %8, %9, %cst_8 {dimension_numbers = #tpu.dot_dimension_numbers<[1], [0], [0], [1], [0, 0, 1, 1], [], []>} : vector<8x256xf32>, vector<256x256xf32>, vector<8x256xf32> -> vector<8x256xf32>
    %c0_9 = arith.constant 0 : index
    %c0_10 = arith.constant 0 : index
    %11 = vector.load %arg5[%c0_9, %c0_10] : memref<1x256xf32, #tpu.memory_space<vmem>>, vector<1x256xf32>
    %12 = vector.broadcast %11 : vector<1x256xf32> to vector<8x256xf32>
    %13 = arith.addf %10, %12 : vector<8x256xf32>
    %cst_11 = arith.constant 1.000000e-01 : f32
    %14 = vector.broadcast %cst_11 : f32 to vector<8x256xf32>
    %15 = arith.mulf %14, %13 : vector<8x256xf32>
    %16 = arith.maximumf %13, %15 : vector<8x256xf32>
    %c0_12 = arith.constant 0 : index
    %c0_13 = arith.constant 0 : index
    %17 = vector.load %arg6[%c0_12, %c0_13] : memref<256x128xf32, #tpu.memory_space<vmem>>, vector<256x128xf32>
    %cst_14 = arith.constant dense<0.000000e+00> : vector<8x128xf32>
    %18 = tpu.matmul %16, %17, %cst_14 {dimension_numbers = #tpu.dot_dimension_numbers<[1], [0], [0], [1], [0, 0, 1, 1], [], []>} : vector<8x256xf32>, vector<256x128xf32>, vector<8x128xf32> -> vector<8x128xf32>
    %c0_15 = arith.constant 0 : index
    %c0_16 = arith.constant 0 : index
    %19 = vector.load %arg7[%c0_15, %c0_16] : memref<1x128xf32, #tpu.memory_space<vmem>>, vector<1x128xf32>
    %20 = vector.broadcast %19 : vector<1x128xf32> to vector<8x128xf32>
    %21 = arith.addf %18, %20 : vector<8x128xf32>
    %cst_17 = arith.constant 1.000000e-01 : f32
    %22 = vector.broadcast %cst_17 : f32 to vector<8x128xf32>
    %23 = arith.mulf %22, %21 : vector<8x128xf32>
    %24 = arith.maximumf %21, %23 : vector<8x128xf32>
    %c0_18 = arith.constant 0 : index
    %c0_19 = arith.constant 0 : index
    %25 = vector.load %arg8[%c0_18, %c0_19] : memref<128x128xf32, #tpu.memory_space<vmem>>, vector<128x128xf32>
    %cst_20 = arith.constant dense<0.000000e+00> : vector<8x128xf32>
    %26 = tpu.matmul %24, %25, %cst_20 {dimension_numbers = #tpu.dot_dimension_numbers<[1], [0], [0], [1], [0, 0, 1, 1], [], []>} : vector<8x128xf32>, vector<128x128xf32>, vector<8x128xf32> -> vector<8x128xf32>
    %c0_21 = arith.constant 0 : index
    %c0_22 = arith.constant 0 : index
    %27 = vector.load %arg9[%c0_21, %c0_22] : memref<1x128xf32, #tpu.memory_space<vmem>>, vector<1x128xf32>
    %28 = vector.broadcast %27 : vector<1x128xf32> to vector<8x128xf32>
    %29 = arith.addf %26, %28 : vector<8x128xf32>
    %cst_23 = arith.constant 1.000000e-01 : f32
    %30 = vector.broadcast %cst_23 : f32 to vector<8x128xf32>
    %31 = arith.mulf %30, %29 : vector<8x128xf32>
    %32 = arith.maximumf %29, %31 : vector<8x128xf32>
    %c0_24 = arith.constant 0 : index
    %c0_25 = arith.constant 0 : index
    %33 = vector.load %arg10[%c0_24, %c0_25] : memref<128x128xf32, #tpu.memory_space<vmem>>, vector<128x128xf32>
    %cst_26 = arith.constant dense<0.000000e+00> : vector<8x128xf32>
    %34 = tpu.matmul %32, %33, %cst_26 {dimension_numbers = #tpu.dot_dimension_numbers<[1], [0], [0], [1], [0, 0, 1, 1], [], []>} : vector<8x128xf32>, vector<128x128xf32>, vector<8x128xf32> -> vector<8x128xf32>
    %c0_27 = arith.constant 0 : index
    %c0_28 = arith.constant 0 : index
    %35 = vector.load %arg11[%c0_27, %c0_28] : memref<1x128xf32, #tpu.memory_space<vmem>>, vector<1x128xf32>
    %36 = vector.broadcast %35 : vector<1x128xf32> to vector<8x128xf32>
    %37 = arith.addf %34, %36 : vector<8x128xf32>
    %38 = math.absf %37 : vector<8x128xf32>
    %cst_29 = arith.constant 1.000000e+00 : f32
    %39 = vector.broadcast %cst_29 : f32 to vector<8x128xf32>
    %40 = arith.addf %39, %38 : vector<8x128xf32>
    %41 = tpu.reciprocal %40 : vector<8x128xf32> -> vector<8x128xf32>
    %42 = arith.mulf %37, %41 : vector<8x128xf32>
    %c0_30 = arith.constant 0 : index
    %c0_31 = arith.constant 0 : index
    %43 = vector.load %arg12[%c0_30, %c0_31] : memref<1x128xf32, #tpu.memory_space<vmem>>, vector<1x128xf32>
    %44 = arith.subf %42, %37 : vector<8x128xf32>
    %45 = vector.broadcast %43 : vector<1x128xf32> to vector<8x128xf32>
    %46 = arith.mulf %45, %44 : vector<8x128xf32>
    %47 = arith.addf %37, %46 : vector<8x128xf32>
    %c0_32 = arith.constant 0 : index
    %c0_33 = arith.constant 0 : index
    %48 = vector.load %arg13[%c0_32, %c0_33] : memref<8x128xf32, #tpu.memory_space<vmem>>, vector<8x128xf32>
    tpu.vector_store %arg13[%c0_32, %c0_33], %47 {strides = array<i32>} : memref<8x128xf32, #tpu.memory_space<vmem>>, vector<8x128xf32>,
    return
  }
  func.func @transform_0(%arg0: i32) -> (i32, i32) {
    %c0_i32 = arith.constant 0 : i32
    %c0_i32_0 = arith.constant 0 : i32
    return %arg0, %c0_i32 : i32, i32
  }
  func.func @transform_1(%arg0: i32) -> (i32, i32) {
    %c0_i32 = arith.constant 0 : i32
    %c0_i32_0 = arith.constant 0 : i32
    %c0_i32_1 = arith.constant 0 : i32
    return %c0_i32, %c0_i32_0 : i32, i32
  }
  func.func @transform_2(%arg0: i32) -> (i32, i32) {
    %c0_i32 = arith.constant 0 : i32
    %c0_i32_0 = arith.constant 0 : i32
    %c0_i32_1 = arith.constant 0 : i32
    return %c0_i32, %c0_i32_0 : i32, i32
  }
  func.func @transform_3(%arg0: i32) -> (i32, i32) {
    %c0_i32 = arith.constant 0 : i32
    %c0_i32_0 = arith.constant 0 : i32
    %c0_i32_1 = arith.constant 0 : i32
    return %c0_i32, %c0_i32_0 : i32, i32
  }
  func.func @transform_4(%arg0: i32) -> (i32, i32) {
    %c0_i32 = arith.constant 0 : i32
    %c0_i32_0 = arith.constant 0 : i32
    %c0_i32_1 = arith.constant 0 : i32
    return %c0_i32, %c0_i32_0 : i32, i32
  }
  func.func @transform_5(%arg0: i32) -> (i32, i32) {
    %c0_i32 = arith.constant 0 : i32
    %c0_i32_0 = arith.constant 0 : i32
    %c0_i32_1 = arith.constant 0 : i32
    return %c0_i32, %c0_i32_0 : i32, i32
  }
  func.func @transform_6(%arg0: i32) -> (i32, i32) {
    %c0_i32 = arith.constant 0 : i32
    %c0_i32_0 = arith.constant 0 : i32
    %c0_i32_1 = arith.constant 0 : i32
    return %c0_i32, %c0_i32_0 : i32, i32
  }
  func.func @transform_7(%arg0: i32) -> (i32, i32) {
    %c0_i32 = arith.constant 0 : i32
    %c0_i32_0 = arith.constant 0 : i32
    %c0_i32_1 = arith.constant 0 : i32
    return %c0_i32, %c0_i32_0 : i32, i32
  }
  func.func @transform_8(%arg0: i32) -> (i32, i32) {
    %c0_i32 = arith.constant 0 : i32
    %c0_i32_0 = arith.constant 0 : i32
    %c0_i32_1 = arith.constant 0 : i32
    return %c0_i32, %c0_i32_0 : i32, i32
  }
  func.func @transform_9(%arg0: i32) -> (i32, i32) {
    %c0_i32 = arith.constant 0 : i32
    %c0_i32_0 = arith.constant 0 : i32
    %c0_i32_1 = arith.constant 0 : i32
    return %c0_i32, %c0_i32_0 : i32, i32
  }
  func.func @transform_10(%arg0: i32) -> (i32, i32) {
    %c0_i32 = arith.constant 0 : i32
    %c0_i32_0 = arith.constant 0 : i32
    %c0_i32_1 = arith.constant 0 : i32
    return %c0_i32, %c0_i32_0 : i32, i32
  }
  func.func @transform_11(%arg0: i32) -> (i32, i32) {
    %c0_i32 = arith.constant 0 : i32
    %c0_i32_0 = arith.constant 0 : i32
    %c0_i32_1 = arith.constant 0 : i32
    return %c0_i32, %c0_i32_0 : i32, i32
  }
  func.func @transform_12(%arg0: i32) -> (i32, i32) {
    %c0_i32 = arith.constant 0 : i32
    %c0_i32_0 = arith.constant 0 : i32
    return %arg0, %c0_i32 : i32, i32
  }
}

</mosaic_0001>

<llo_original>
// kernel: tpu_custom_call.1
$region0: #{tpu_custom_call.1}
  #allocation0 [shape = 'u32[]', space=smem, size = 0x4, offset = 0x4, fixed_abs, tag = 'smem constant byte address 0x4 - core index']
  #allocation1 [shape = 'u32[144,128]{1,0:T(1,128)}', space=vmem, size = 0x12000, scoped, tag = 'internal scratch']
  %s0 = inlined_call_operand.hbm [shape: f32[8,32], index: 0, kind: input, shape index: {}]
  %s1 = inlined_call_operand.hbm [shape: f32[32,256], index: 1, kind: input, shape index: {}]
  %s2 = inlined_call_operand.vmem [shape: f32[1,256], index: 2, kind: input, shape index: {}]
  %s3 = inlined_call_operand.hbm [shape: f32[256,256], index: 3, kind: input, shape index: {}]
  %s4 = inlined_call_operand.vmem [shape: f32[1,256], index: 4, kind: input, shape index: {}]
  %s5 = inlined_call_operand.hbm [shape: f32[256,128], index: 5, kind: input, shape index: {}]
  %s6 = inlined_call_operand.vmem [shape: f32[1,128], index: 6, kind: input, shape index: {}]
  %s7 = inlined_call_operand.hbm [shape: f32[128,128], index: 7, kind: input, shape index: {}]
  %s8 = inlined_call_operand.vmem [shape: f32[1,128], index: 8, kind: input, shape index: {}]
  %s9 = inlined_call_operand.hbm [shape: f32[128,128], index: 9, kind: input, shape index: {}]
  %s10 = inlined_call_operand.vmem [shape: f32[1,128], index: 10, kind: input, shape index: {}]
  %s11 = inlined_call_operand.vmem [shape: f32[1,128], index: 11, kind: input, shape index: {}]
  %s12 = inlined_call_operand.hbm [shape: f32[8,128], index: 12, kind: output, shape index: {}]
  %s13 = sld [smem:[#allocation0]]
  $region82: #{tpu_custom_call.1} parent=0
    _
  %s15 = ssub.s32 1, %s13
  %s16 = scalar_select 0, %s15, %s13
  $region1: #{tpu_custom_call.1} parent=0
    #allocation2 [shape = 'u8[4096]{0}', space=vmem, size = 0x1000, scoped, tag = 'input window, operand 0, single buffered']
    #allocation3 [shape = 's32[1]{0}', space=sflag, size = 0x4, scoped, tag = 'scoped memory for tpu_custom_call.1']
    #allocation4 [shape = 's32[1]{0}', space=sflag, size = 0x4, scoped, tag = 'scoped memory for tpu_custom_call.1']
    #allocation5 [shape = 'u8[32768]{0}', space=vmem, size = 0x8000, scoped, tag = 'input window, operand 1, single buffered']
    #allocation6 [shape = 's32[1]{0}', space=sflag, size = 0x4, scoped, tag = 'scoped memory for tpu_custom_call.1']
    #allocation7 [shape = 'u8[262144]{0}', space=vmem, size = 0x40000, scoped, tag = 'input window, operand 3, single buffered']
    #allocation8 [shape = 'u8[131072]{0}', space=vmem, size = 0x20000, scoped, tag = 'input window, operand 5, single buffered']
    #allocation9 [shape = 's32[1]{0}', space=sflag, size = 0x4, scoped, tag = 'scoped memory for tpu_custom_call.1']
    #allocation10 [shape = 'u8[65536]{0}', space=vmem, size = 0x10000, scoped, tag = 'input window, operand 7, single buffered']
    #allocation11 [shape = 'u8[65536]{0}', space=vmem, size = 0x10000, scoped, tag = 'input window, operand 9, single buffered']
    #allocation12 [shape = 's32[1]{0}', space=sflag, size = 0x4, scoped, tag = 'scoped memory for tpu_custom_call.1']
    #allocation13 [shape = 'u8[4096]{0}', space=vmem, size = 0x1000, scoped, tag = 'output window, operand 0, single buffered']
    %17 = vsyncpa [#allocation3], 0
    %18 = vsyncpa [#allocation6], 0
    %19 = vsyncpa [#allocation9], 0
    %20 = vsyncpa [#allocation12], 0
    %21 = vsyncpa [#allocation4], 0
    // Predicated region
    $region2: #{tpu_custom_call.1} parent=1 // pred_check
      _
    $region3: #{tpu_custom_call.1} parent=1 // pred_check_branch
      %23 = sbr.rel (0) target = $region5
    $region4: #{tpu_custom_call.1} parent=1 // pred_region
      %s25 = ssub.s32 128, 128
      %26 = vsyncadd [#allocation3], %s25
      %s28 = sshll.u32 [#allocation2], 4
      %s29 = int_to_ptr.vmem [resolvable:$true] %s28
      %31 = dma.hbm_to_vmem [thread:$0]  %s0, 128, %s29, [#allocation3]
    $region5: #{tpu_custom_call.1} parent=1 // pred_fallthru
      _
    // Predicated region
    $region6: #{tpu_custom_call.1} parent=1 // pred_check
      _
    $region7: #{tpu_custom_call.1} parent=1 // pred_check_branch
      %33 = sbr.rel (0) target = $region9
    $region8: #{tpu_custom_call.1} parent=1 // pred_region
      %s35 = ssub.s32 1024, 1024
      %36 = vsyncadd [#allocation6], %s35
      %s37 = sshll.u32 [#allocation5], 4
      %s38 = int_to_ptr.vmem [resolvable:$true] %s37
      %43 = dma.hbm_to_vmem [thread:$0]  %s1, 1024, %s38, [#allocation6], 256, 256, 16
    $region9: #{tpu_custom_call.1} parent=1 // pred_fallthru
      _
    // Predicated region
    $region10: #{tpu_custom_call.1} parent=1 // pred_check
      _
    $region11: #{tpu_custom_call.1} parent=1 // pred_check_branch
      %45 = sbr.rel (0) target = $region13
    $region12: #{tpu_custom_call.1} parent=1 // pred_region
      _
    $region13: #{tpu_custom_call.1} parent=1 // pred_fallthru
      _
    // Predicated region
    $region14: #{tpu_custom_call.1} parent=1 // pred_check
      _
    $region15: #{tpu_custom_call.1} parent=1 // pred_check_branch
      %47 = sbr.rel (0) target = $region17
    $region16: #{tpu_custom_call.1} parent=1 // pred_region
      %s49 = ssub.s32 8192, 8192
      %50 = vsyncadd [#allocation6], %s49
      %s51 = sshll.u32 [#allocation7], 4
      %s52 = int_to_ptr.vmem [resolvable:$true] %s51
      %57 = dma.hbm_to_vmem [thread:$0]  %s3, 8192, %s52, [#allocation6], 256, 256, 16
    $region17: #{tpu_custom_call.1} parent=1 // pred_fallthru
      _
    // Predicated region
    $region18: #{tpu_custom_call.1} parent=1 // pred_check
      _
    $region19: #{tpu_custom_call.1} parent=1 // pred_check_branch
      %59 = sbr.rel (0) target = $region21
    $region20: #{tpu_custom_call.1} parent=1 // pred_region
      _
    $region21: #{tpu_custom_call.1} parent=1 // pred_fallthru
      _
    // Predicated region
    $region22: #{tpu_custom_call.1} parent=1 // pred_check
      _
    $region23: #{tpu_custom_call.1} parent=1 // pred_check_branch
      %61 = sbr.rel (0) target = $region25
    $region24: #{tpu_custom_call.1} parent=1 // pred_region
      %s63 = ssub.s32 4096, 4096
      %64 = vsyncadd [#allocation9], %s63
      %s65 = sshll.u32 [#allocation8], 4
      %s66 = int_to_ptr.vmem [resolvable:$true] %s65
      %71 = dma.hbm_to_vmem [thread:$0]  %s5, 4096, %s66, [#allocation9], 128, 128, 8
    $region25: #{tpu_custom_call.1} parent=1 // pred_fallthru
      _
    // Predicated region
    $region26: #{tpu_custom_call.1} parent=1 // pred_check
      _
    $region27: #{tpu_custom_call.1} parent=1 // pred_check_branch
      %73 = sbr.rel (0) target = $region29
    $region28: #{tpu_custom_call.1} parent=1 // pred_region
      _
    $region29: #{tpu_custom_call.1} parent=1 // pred_fallthru
      _
    // Predicated region
    $region30: #{tpu_custom_call.1} parent=1 // pred_check
      _
    $region31: #{tpu_custom_call.1} parent=1 // pred_check_branch
      %75 = sbr.rel (0) target = $region33
    $region32: #{tpu_custom_call.1} parent=1 // pred_region
      %s77 = ssub.s32 2048, 2048
      %78 = vsyncadd [#allocation9], %s77
      %s79 = sshll.u32 [#allocation10], 4
      %s80 = int_to_ptr.vmem [resolvable:$true] %s79
      %85 = dma.hbm_to_vmem [thread:$0]  %s7, 2048, %s80, [#allocation9], 128, 128, 8
    $region33: #{tpu_custom_call.1} parent=1 // pred_fallthru
      _
    // Predicated region
    $region34: #{tpu_custom_call.1} parent=1 // pred_check
      _
    $region35: #{tpu_custom_call.1} parent=1 // pred_check_branch
      %87 = sbr.rel (0) target = $region37
    $region36: #{tpu_custom_call.1} parent=1 // pred_region
      _
    $region37: #{tpu_custom_call.1} parent=1 // pred_fallthru
      _
    // Predicated region
    $region38: #{tpu_custom_call.1} parent=1 // pred_check
      _
    $region39: #{tpu_custom_call.1} parent=1 // pred_check_branch
      %89 = sbr.rel (0) target = $region41
    $region40: #{tpu_custom_call.1} parent=1 // pred_region
      %s91 = ssub.s32 2048, 2048
      %92 = vsyncadd [#allocation12], %s91
      %s93 = sshll.u32 [#allocation11], 4
      %s94 = int_to_ptr.vmem [resolvable:$true] %s93
      %99 = dma.hbm_to_vmem [thread:$0]  %s9, 2048, %s94, [#allocation12], 128, 128, 8
    $region41: #{tpu_custom_call.1} parent=1 // pred_fallthru
      _
    // Predicated region
    $region42: #{tpu_custom_call.1} parent=1 // pred_check
      _
    $region43: #{tpu_custom_call.1} parent=1 // pred_check_branch
      %101 = sbr.rel (0) target = $region45
    $region44: #{tpu_custom_call.1} parent=1 // pred_region
      _
    $region45: #{tpu_custom_call.1} parent=1 // pred_fallthru
      _
    // Predicated region
    $region46: #{tpu_custom_call.1} parent=1 // pred_check
      _
    $region47: #{tpu_custom_call.1} parent=1 // pred_check_branch
      %103 = sbr.rel (0) target = $region49
    $region48: #{tpu_custom_call.1} parent=1 // pred_region
      _
    $region49: #{tpu_custom_call.1} parent=1 // pred_fallthru
      _
    // Predicated region
    $region50: #{tpu_custom_call.1} parent=1 // pred_check
      _
    $region51: #{tpu_custom_call.1} parent=1 // pred_check_branch
      %105 = sbr.rel (0) target = $region53
    $region52: #{tpu_custom_call.1} parent=1 // pred_region
      %106 = dma.done [#allocation3], 128
    $region53: #{tpu_custom_call.1} parent=1 // pred_fallthru
      _
    // Predicated region
    $region54: #{tpu_custom_call.1} parent=1 // pred_check
      _
    $region55: #{tpu_custom_call.1} parent=1 // pred_check_branch
      %108 = sbr.rel (0) target = $region57
    $region56: #{tpu_custom_call.1} parent=1 // pred_region
      %109 = dma.done [#allocation6], 1024
    $region57: #{tpu_custom_call.1} parent=1 // pred_fallthru
      _
    // Predicated region
    $region58: #{tpu_custom_call.1} parent=1 // pred_check
      _
    $region59: #{tpu_custom_call.1} parent=1 // pred_check_branch
      %111 = sbr.rel (0) target = $region61
    $region60: #{tpu_custom_call.1} parent=1 // pred_region
      %112 = dma.done [#allocation6], 8192
    $region61: #{tpu_custom_call.1} parent=1 // pred_fallthru
      _
    // Predicated region
    $region62: #{tpu_custom_call.1} parent=1 // pred_check
      _
    $region63: #{tpu_custom_call.1} parent=1 // pred_check_branch
      %114 = sbr.rel (0) target = $region65
    $region64: #{tpu_custom_call.1} parent=1 // pred_region
      %115 = dma.done [#allocation9], 4096
    $region65: #{tpu_custom_call.1} parent=1 // pred_fallthru
      _
    // Predicated region
    $region66: #{tpu_custom_call.1} parent=1 // pred_check
      _
    $region67: #{tpu_custom_call.1} parent=1 // pred_check_branch
      %117 = sbr.rel (0) target = $region69
    $region68: #{tpu_custom_call.1} parent=1 // pred_region
      %118 = dma.done [#allocation9], 2048
    $region69: #{tpu_custom_call.1} parent=1 // pred_fallthru
      _
    // Predicated region
    $region70: #{tpu_custom_call.1} parent=1 // pred_check
      _
    $region71: #{tpu_custom_call.1} parent=1 // pred_check_branch
      %120 = sbr.rel (0) target = $region73
    $region72: #{tpu_custom_call.1} parent=1 // pred_region
      %121 = dma.done [#allocation12], 2048
    $region73: #{tpu_custom_call.1} parent=1 // pred_fallthru
      _
    %v122 = vld [vmem:[#allocation2] sm:$0xff]
    %v123 = vld [vmem:[#allocation5] sm:$0xff]
    %v124 = vld [vmem:[#allocation5 + $0x8] sm:$0xff]
    %v125 = vld [vmem:[#allocation5 + $0x10] sm:$0xff]
    %v126 = vld [vmem:[#allocation5 + $0x18] sm:$0xff]
    %v127 = vld [vmem:[#allocation5 + $0x20] sm:$0xff]
    %v128 = vld [vmem:[#allocation5 + $0x28] sm:$0xff]
    %v129 = vld [vmem:[#allocation5 + $0x30] sm:$0xff]
    %v130 = vld [vmem:[#allocation5 + $0x38] sm:$0xff]
    %v131 = vld [vmem:[%s2] sm:$0x3]
    %v133 = vlaneseq
    %v134 = vshrl.u32 %v133, 7
    %v135 = vsub.s32 0, %v134
    %v136 = vrot.slane %v131, %v135
    %v137 = vlaneseq
    %v138 = vshrl.u32 %v137, 7
    %v139 = vsub.s32 1, %v138
    %v140 = vrot.slane %v131, %v139
    %vm143 = vcmask 261120
    %v145 = vsel %vm143, %v122, 0
    %147 = vmatprep.subr.mxu0 %v124
    %148 = vmatpush1.msra.mxu0 %v123
    %149 = vmatprep.subr.mxu0 %v126
    %150 = vmatpush1.msra.mxu0 %v125
    %151 = vmatprep.subr.mxu0 %v128
    %152 = vmatpush1.msra.mxu0 %v127
    %153 = vmatprep.subr.mxu0 %v130
    %154 = vmatpush1.msra.mxu0 %v129
    %155 = vmatprep.subr.mxu0 0.0
    %156 = vmatpush1.msra.mxu0 0.0
    %157 = vmatprep.subr.mxu0 0.0
    %158 = vmatpush1.msra.mxu0 0.0
    %159 = vmatprep.subr.mxu0 0.0
    %160 = vmatpush1.msra.mxu0 0.0
    %161 = vmatprep.subr.mxu0 0.0
    %162 = vmatpush1.msra.mxu0 0.0
    %163 = vmatprep.subr.mxu0 0.0
    %164 = vmatpush1.msra.mxu0 0.0
    %165 = vmatprep.subr.mxu0 0.0
    %166 = vmatpush1.msra.mxu0 0.0
    %167 = vmatprep.subr.mxu0 0.0
    %168 = vmatpush1.msra.mxu0 0.0
    %169 = vmatprep.subr.mxu0 0.0
    %170 = vmatpush1.msra.mxu0 0.0
    %171 = vmatprep.subr.mxu0 0.0
    %172 = vmatpush1.msra.mxu0 0.0
    %173 = vmatprep.subr.mxu0 0.0
    %174 = vmatpush1.msra.mxu0 0.0
    %175 = vmatprep.subr.mxu0 0.0
    %176 = vmatpush1.msra.mxu0 0.0
    %177 = vmatprep.subr.mxu0 0.0
    %178 = vmatpush1.msra.mxu0 0.0
    %179 = vmatprep.subr.mxu0 0.0
    %180 = vmatpush1.msra.mxu0 0.0
    %181 = vmatprep.subr.mxu0 0.0
    %182 = vmatpush1.msra.mxu0 0.0
    %183 = vmatprep.subr.mxu0 0.0
    %184 = vmatpush1.msra.mxu0 0.0
    %185 = vmatprep.subr.mxu0 0.0
    %186 = vmatpush1.msra.mxu0 0.0
    %187 = vmatprep.subr.mxu0 0.0
    %188 = vmatpush1.msra.mxu0 0.0
    %189 = vmatprep.subr.mxu0 0.0
    %190 = vmatpush1.msra.mxu0 0.0
    %191 = vmatprep.subr.mxu0 0.0
    %192 = vmatpush1.msra.mxu0 0.0
    %193 = vmatprep.subr.mxu0 0.0
    %194 = vmatpush1.msra.mxu0 0.0
    %195 = vmatprep.subr.mxu0 0.0
    %196 = vmatpush1.msra.mxu0 0.0
    %197 = vmatprep.subr.mxu0 0.0
    %198 = vmatpush1.msra.mxu0 0.0
    %199 = vmatprep.subr.mxu0 0.0
    %200 = vmatpush1.msra.mxu0 0.0
    %201 = vmatprep.subr.mxu0 0.0
    %202 = vmatpush1.msra.mxu0 0.0
    %203 = vmatprep.subr.mxu0 0.0
    %204 = vmatpush1.msra.mxu0 0.0
    %205 = vmatprep.subr.mxu0 0.0
    %206 = vmatpush1.msra.mxu0 0.0
    %207 = vmatprep.subr.mxu0 0.0
    %208 = vmatpush1.msra.mxu0 0.0
    %209 = vmatprep.subr.mxu0 0.0
    %210 = vmatpush1.msra.mxu0 0.0
    %211 = vmatprep.mubr.f32.mxu0 0.0
    %212 = vmatmul.mubr.f32.gmra.mrb[0].mxu0 %v145
    %v213 = vpop.f32.mrb[0].mxu0
    %v214 = vadd.f32 %v136, %v213
    %v215 = vpop.f32.mrb[0].mxu0
    %v216 = vadd.f32 %v140, %v215
    %217 = vdwg.mxu0
    %v218 = vmul.f32 %v214, 0.1
    %v219 = vmul.f32 %v216, 0.1
    %v220 = vmax.f32 %v214, %v218
    %v221 = vmax.f32 %v216, %v219
    %v222 = vld [vmem:[#allocation7] sm:$0xff]
    %v223 = vld [vmem:[#allocation7 + $0x8] sm:$0xff]
    %v224 = vld [vmem:[#allocation7 + $0x10] sm:$0xff]
    %v225 = vld [vmem:[#allocation7 + $0x18] sm:$0xff]
    %v226 = vld [vmem:[#allocation7 + $0x20] sm:$0xff]
    %v227 = vld [vmem:[#allocation7 + $0x28] sm:$0xff]
    %v228 = vld [vmem:[#allocation7 + $0x30] sm:$0xff]
    %v229 = vld [vmem:[#allocation7 + $0x38] sm:$0xff]
    %v230 = vld [vmem:[#allocation7 + $0x40] sm:$0xff]
    %v231 = vld [vmem:[#allocation7 + $0x48] sm:$0xff]
    %v232 = vld [vmem:[#allocation7 + $0x50] sm:$0xff]
    %v233 = vld [vmem:[#allocation7 + $0x58] sm:$0xff]
    %v234 = vld [vmem:[#allocation7 + $0x60] sm:$0xff]
    %v235 = vld [vmem:[#allocation7 + $0x68] sm:$0xff]
    %v236 = vld [vmem:[#allocation7 + $0x70] sm:$0xff]
    %v237 = vld [vmem:[#allocation7 + $0x78] sm:$0xff]
    %v238 = vld [vmem:[#allocation7 + $0x80] sm:$0xff]
    %v239 = vld [vmem:[#allocation7 + $0x88] sm:$0xff]
    %v240 = vld [vmem:[#allocation7 + $0x90] sm:$0xff]
    %v241 = vld [vmem:[#allocation7 + $0x98] sm:$0xff]
    %v242 = vld [vmem:[#allocation7 + $0xa0] sm:$0xff]
    %v243 = vld [vmem:[#allocation7 + $0xa8] sm:$0xff]
    %v244 = vld [vmem:[#allocation7 + $0xb0] sm:$0xff]
    %v245 = vld [vmem:[#allocation7 + $0xb8] sm:$0xff]
    %v246 = vld [vmem:[#allocation7 + $0xc0] sm:$0xff]
    %v247 = vld [vmem:[#allocation7 + $0xc8] sm:$0xff]
    %v248 = vld [vmem:[#allocation7 + $0xd0] sm:$0xff]
    %v249 = vld [vmem:[#allocation7 + $0xd8] sm:$0xff]
    %v250 = vld [vmem:[#allocation7 + $0xe0] sm:$0xff]
    %v251 = vld [vmem:[#allocation7 + $0xe8] sm:$0xff]
    %v252 = vld [vmem:[#allocation7 + $0xf0] sm:$0xff]
    %v253 = vld [vmem:[#allocation7 + $0xf8] sm:$0xff]
    %v254 = vld [vmem:[#allocation7 + $0x100] sm:$0xff]
    %v255 = vld [vmem:[#allocation7 + $0x108] sm:$0xff]
    %v256 = vld [vmem:[#allocation7 + $0x110] sm:$0xff]
    %v257 = vld [vmem:[#allocation7 + $0x118] sm:$0xff]
    %v258 = vld [vmem:[#allocation7 + $0x120] sm:$0xff]
    %v259 = vld [vmem:[#allocation7 + $0x128] sm:$0xff]
    %v260 = vld [vmem:[#allocation7 + $0x130] sm:$0xff]
    %v261 = vld [vmem:[#allocation7 + $0x138] sm:$0xff]
    %v262 = vld [vmem:[#allocation7 + $0x140] sm:$0xff]
    %v263 = vld [vmem:[#allocation7 + $0x148] sm:$0xff]
    %v264 = vld [vmem:[#allocation7 + $0x150] sm:$0xff]
    %v265 = vld [vmem:[#allocation7 + $0x158] sm:$0xff]
    %v266 = vld [vmem:[#allocation7 + $0x160] sm:$0xff]
    %v267 = vld [vmem:[#allocation7 + $0x168] sm:$0xff]
    %v268 = vld [vmem:[#allocation7 + $0x170] sm:$0xff]
    %v269 = vld [vmem:[#allocation7 + $0x178] sm:$0xff]
    %v270 = vld [vmem:[#allocation7 + $0x180] sm:$0xff]
    %v271 = vld [vmem:[#allocation7 + $0x188] sm:$0xff]
    %v272 = vld [vmem:[#allocation7 + $0x190] sm:$0xff]
    %v273 = vld [vmem:[#allocation7 + $0x198] sm:$0xff]
    %v274 = vld [vmem:[#allocation7 + $0x1a0] sm:$0xff]
    %v275 = vld [vmem:[#allocation7 + $0x1a8] sm:$0xff]
    %v276 = vld [vmem:[#allocation7 + $0x1b0] sm:$0xff]
    %v277 = vld [vmem:[#allocation7 + $0x1b8] sm:$0xff]
    %v278 = vld [vmem:[#allocation7 + $0x1c0] sm:$0xff]
    %v279 = vld [vmem:[#allocation7 + $0x1c8] sm:$0xff]
    %v280 = vld [vmem:[#allocation7 + $0x1d0] sm:$0xff]
    %v281 = vld [vmem:[#allocation7 + $0x1d8] sm:$0xff]
    %v282 = vld [vmem:[#allocation7 + $0x1e0] sm:$0xff]
    %v283 = vld [vmem:[#allocation7 + $0x1e8] sm:$0xff]
    %v284 = vld [vmem:[#allocation7 + $0x1f0] sm:$0xff]
    %v285 = vld [vmem:[#allocation7 + $0x1f8] sm:$0xff]
    %v286 = vld [vmem:[%s4] sm:$0x3]
    %v288 = vlaneseq
    %v289 = vshrl.u32 %v288, 7
    %v290 = vsub.s32 0, %v289
    %v291 = vrot.slane %v286, %v290
    %v292 = vlaneseq
    %v293 = vshrl.u32 %v292, 7
    %v294 = vsub.s32 1, %v293
    %v295 = vrot.slane %v286, %v294
    %298 = vmatprep.subr.mxu0 %v223
    %299 = vmatpush1.msra.mxu0 %v222
    %300 = vmatprep.subr.mxu0 %v225
    %301 = vmatpush1.msra.mxu0 %v224
    %302 = vmatprep.subr.mxu0 %v227
    %303 = vmatpush1.msra.mxu0 %v226
    %304 = vmatprep.subr.mxu0 %v229
    %305 = vmatpush1.msra.mxu0 %v228
    %306 = vmatprep.subr.mxu0 %v231
    %307 = vmatpush1.msra.mxu0 %v230
    %308 = vmatprep.subr.mxu0 %v233
    %309 = vmatpush1.msra.mxu0 %v232
    %310 = vmatprep.subr.mxu0 %v235
    %311 = vmatpush1.msra.mxu0 %v234
    %312 = vmatprep.subr.mxu0 %v237
    %313 = vmatpush1.msra.mxu0 %v236
    %314 = vmatprep.subr.mxu0 %v239
    %315 = vmatpush1.msra.mxu0 %v238
    %316 = vmatprep.subr.mxu0 %v241
    %317 = vmatpush1.msra.mxu0 %v240
    %318 = vmatprep.subr.mxu0 %v243
    %319 = vmatpush1.msra.mxu0 %v242
    %320 = vmatprep.subr.mxu0 %v245
    %321 = vmatpush1.msra.mxu0 %v244
    %322 = vmatprep.subr.mxu0 %v247
    %323 = vmatpush1.msra.mxu0 %v246
    %324 = vmatprep.subr.mxu0 %v249
    %325 = vmatpush1.msra.mxu0 %v248
    %326 = vmatprep.subr.mxu0 %v251
    %327 = vmatpush1.msra.mxu0 %v250
    %328 = vmatprep.subr.mxu0 %v253
    %329 = vmatpush1.msra.mxu0 %v252
    %330 = vmatprep.subr.mxu0 %v255
    %331 = vmatpush1.msra.mxu0 %v254
    %332 = vmatprep.subr.mxu0 %v257
    %333 = vmatpush1.msra.mxu0 %v256
    %334 = vmatprep.subr.mxu0 %v259
    %335 = vmatpush1.msra.mxu0 %v258
    %336 = vmatprep.subr.mxu0 %v261
    %337 = vmatpush1.msra.mxu0 %v260
    %338 = vmatprep.subr.mxu0 %v263
    %339 = vmatpush1.msra.mxu0 %v262
    %340 = vmatprep.subr.mxu0 %v265
    %341 = vmatpush1.msra.mxu0 %v264
    %342 = vmatprep.subr.mxu0 %v267
    %343 = vmatpush1.msra.mxu0 %v266
    %344 = vmatprep.subr.mxu0 %v269
    %345 = vmatpush1.msra.mxu0 %v268
    %346 = vmatprep.subr.mxu0 %v271
    %347 = vmatpush1.msra.mxu0 %v270
    %348 = vmatprep.subr.mxu0 %v273
    %349 = vmatpush1.msra.mxu0 %v272
    %350 = vmatprep.subr.mxu0 %v275
    %351 = vmatpush1.msra.mxu0 %v274
    %352 = vmatprep.subr.mxu0 %v277
    %353 = vmatpush1.msra.mxu0 %v276
    %354 = vmatprep.subr.mxu0 %v279
    %355 = vmatpush1.msra.mxu0 %v278
    %356 = vmatprep.subr.mxu0 %v281
    %357 = vmatpush1.msra.mxu0 %v280
    %358 = vmatprep.subr.mxu0 %v283
    %359 = vmatpush1.msra.mxu0 %v282
    %360 = vmatprep.subr.mxu0 %v285
    %361 = vmatpush1.msra.mxu0 %v284
    %362 = vmatprep.mubr.f32.mxu0 %v221
    %363 = vmatmul.mubr.f32.gmra.mrb[0].mxu0 %v220
    %v364 = vpop.f32.mrb[0].mxu0
    %v365 = vadd.f32 %v291, %v364
    %v366 = vpop.f32.mrb[0].mxu0
    %v367 = vadd.f32 %v295, %v366
    %368 = vdwg.mxu0
    %v369 = vmul.f32 %v365, 0.1
    %v370 = vmul.f32 %v367, 0.1
    %v371 = vmax.f32 %v365, %v369
    %v372 = vmax.f32 %v367, %v370
    %v373 = vld [vmem:[#allocation8] sm:$0xff]
    %v374 = vld [vmem:[#allocation8 + $0x8] sm:$0xff]
    %v375 = vld [vmem:[#allocation8 + $0x10] sm:$0xff]
    %v376 = vld [vmem:[#allocation8 + $0x18] sm:$0xff]
    %v377 = vld [vmem:[#allocation8 + $0x20] sm:$0xff]
    %v378 = vld [vmem:[#allocation8 + $0x28] sm:$0xff]
    %v379 = vld [vmem:[#allocation8 + $0x30] sm:$0xff]
    %v380 = vld [vmem:[#allocation8 + $0x38] sm:$0xff]
    %v381 = vld [vmem:[#allocation8 + $0x40] sm:$0xff]
    %v382 = vld [vmem:[#allocation8 + $0x48] sm:$0xff]
    %v383 = vld [vmem:[#allocation8 + $0x50] sm:$0xff]
    %v384 = vld [vmem:[#allocation8 + $0x58] sm:$0xff]
    %v385 = vld [vmem:[#allocation8 + $0x60] sm:$0xff]
    %v386 = vld [vmem:[#allocation8 + $0x68] sm:$0xff]
    %v387 = vld [vmem:[#allocation8 + $0x70] sm:$0xff]
    %v388 = vld [vmem:[#allocation8 + $0x78] sm:$0xff]
    %v389 = vld [vmem:[#allocation8 + $0x80] sm:$0xff]
    %v390 = vld [vmem:[#allocation8 + $0x88] sm:$0xff]
    %v391 = vld [vmem:[#allocation8 + $0x90] sm:$0xff]
    %v392 = vld [vmem:[#allocation8 + $0x98] sm:$0xff]
    %v393 = vld [vmem:[#allocation8 + $0xa0] sm:$0xff]
    %v394 = vld [vmem:[#allocation8 + $0xa8] sm:$0xff]
    %v395 = vld [vmem:[#allocation8 + $0xb0] sm:$0xff]
    %v396 = vld [vmem:[#allocation8 + $0xb8] sm:$0xff]
    %v397 = vld [vmem:[#allocation8 + $0xc0] sm:$0xff]
    %v398 = vld [vmem:[#allocation8 + $0xc8] sm:$0xff]
    %v399 = vld [vmem:[#allocation8 + $0xd0] sm:$0xff]
    %v400 = vld [vmem:[#allocation8 + $0xd8] sm:$0xff]
    %v401 = vld [vmem:[#allocation8 + $0xe0] sm:$0xff]
    %v402 = vld [vmem:[#allocation8 + $0xe8] sm:$0xff]
    %v403 = vld [vmem:[#allocation8 + $0xf0] sm:$0xff]
    %v404 = vld [vmem:[#allocation8 + $0xf8] sm:$0xff]
    %v405 = vld [vmem:[%s6] sm:$0x1]
    %v407 = vlaneseq
    %v408 = vshrl.u32 %v407, 7
    %v409 = vsub.s32 0, %v408
    %v410 = vrot.slane %v405, %v409
    %412 = vmatprep.subr.mxu0 0.0
    %413 = vmatpush1.msra.mxu0 %v373
    %414 = vmatprep.subr.mxu0 0.0
    %415 = vmatpush1.msra.mxu0 %v374
    %416 = vmatprep.subr.mxu0 0.0
    %417 = vmatpush1.msra.mxu0 %v375
    %418 = vmatprep.subr.mxu0 0.0
    %419 = vmatpush1.msra.mxu0 %v376
    %420 = vmatprep.subr.mxu0 0.0
    %421 = vmatpush1.msra.mxu0 %v377
    %422 = vmatprep.subr.mxu0 0.0
    %423 = vmatpush1.msra.mxu0 %v378
    %424 = vmatprep.subr.mxu0 0.0
    %425 = vmatpush1.msra.mxu0 %v379
    %426 = vmatprep.subr.mxu0 0.0
    %427 = vmatpush1.msra.mxu0 %v380
    %428 = vmatprep.subr.mxu0 0.0
    %429 = vmatpush1.msra.mxu0 %v381
    %430 = vmatprep.subr.mxu0 0.0
    %431 = vmatpush1.msra.mxu0 %v382
    %432 = vmatprep.subr.mxu0 0.0
    %433 = vmatpush1.msra.mxu0 %v383
    %434 = vmatprep.subr.mxu0 0.0
    %435 = vmatpush1.msra.mxu0 %v384
    %436 = vmatprep.subr.mxu0 0.0
    %437 = vmatpush1.msra.mxu0 %v385
    %438 = vmatprep.subr.mxu0 0.0
    %439 = vmatpush1.msra.mxu0 %v386
    %440 = vmatprep.subr.mxu0 0.0
    %441 = vmatpush1.msra.mxu0 %v387
    %442 = vmatprep.subr.mxu0 0.0
    %443 = vmatpush1.msra.mxu0 %v388
    %444 = vmatprep.subr.mxu0 0.0
    %445 = vmatpush1.msra.mxu0 %v389
    %446 = vmatprep.subr.mxu0 0.0
    %447 = vmatpush1.msra.mxu0 %v390
    %448 = vmatprep.subr.mxu0 0.0
    %449 = vmatpush1.msra.mxu0 %v391
    %450 = vmatprep.subr.mxu0 0.0
    %451 = vmatpush1.msra.mxu0 %v392
    %452 = vmatprep.subr.mxu0 0.0
    %453 = vmatpush1.msra.mxu0 %v393
    %454 = vmatprep.subr.mxu0 0.0
    %455 = vmatpush1.msra.mxu0 %v394
    %456 = vmatprep.subr.mxu0 0.0
    %457 = vmatpush1.msra.mxu0 %v395
    %458 = vmatprep.subr.mxu0 0.0
    %459 = vmatpush1.msra.mxu0 %v396
    %460 = vmatprep.subr.mxu0 0.0
    %461 = vmatpush1.msra.mxu0 %v397
    %462 = vmatprep.subr.mxu0 0.0
    %463 = vmatpush1.msra.mxu0 %v398
    %464 = vmatprep.subr.mxu0 0.0
    %465 = vmatpush1.msra.mxu0 %v399
    %466 = vmatprep.subr.mxu0 0.0
    %467 = vmatpush1.msra.mxu0 %v400
    %468 = vmatprep.subr.mxu0 0.0
    %469 = vmatpush1.msra.mxu0 %v401
    %470 = vmatprep.subr.mxu0 0.0
    %471 = vmatpush1.msra.mxu0 %v402
    %472 = vmatprep.subr.mxu0 0.0
    %473 = vmatpush1.msra.mxu0 %v403
    %474 = vmatprep.subr.mxu0 0.0
    %475 = vmatpush1.msra.mxu0 %v404
    %476 = vmatprep.mubr.f32.mxu0 %v372
    %477 = vmatmul.mubr.f32.gmra.mrb[0].mxu0 %v371
    %v478 = vpop.f32.mrb[0].mxu0
    %v479 = vadd.f32 %v410, %v478
    %v480 = vpop.f32.mrb[0].mxu0
    %481 = vdwg.mxu0
    %v482 = vmul.f32 %v479, 0.1
    %v483 = vmax.f32 %v479, %v482
    %v484 = vld [vmem:[#allocation10] sm:$0xff]
    %v485 = vld [vmem:[#allocation10 + $0x8] sm:$0xff]
    %v486 = vld [vmem:[#allocation10 + $0x10] sm:$0xff]
    %v487 = vld [vmem:[#allocation10 + $0x18] sm:$0xff]
    %v488 = vld [vmem:[#allocation10 + $0x20] sm:$0xff]
    %v489 = vld [vmem:[#allocation10 + $0x28] sm:$0xff]
    %v490 = vld [vmem:[#allocation10 + $0x30] sm:$0xff]
    %v491 = vld [vmem:[#allocation10 + $0x38] sm:$0xff]
    %v492 = vld [vmem:[#allocation10 + $0x40] sm:$0xff]
    %v493 = vld [vmem:[#allocation10 + $0x48] sm:$0xff]
    %v494 = vld [vmem:[#allocation10 + $0x50] sm:$0xff]
    %v495 = vld [vmem:[#allocation10 + $0x58] sm:$0xff]
    %v496 = vld [vmem:[#allocation10 + $0x60] sm:$0xff]
    %v497 = vld [vmem:[#allocation10 + $0x68] sm:$0xff]
    %v498 = vld [vmem:[#allocation10 + $0x70] sm:$0xff]
    %v499 = vld [vmem:[#allocation10 + $0x78] sm:$0xff]
    %v500 = vld [vmem:[%s8] sm:$0x1]
    %v502 = vlaneseq
    %v503 = vshrl.u32 %v502, 7
    %v504 = vsub.s32 0, %v503
    %v505 = vrot.slane %v500, %v504
    %507 = vmatprep.subr.mxu0 0.0
    %508 = vmatpush1.msra.mxu0 %v484
    %509 = vmatprep.subr.mxu0 0.0
    %510 = vmatpush1.msra.mxu0 %v485
    %511 = vmatprep.subr.mxu0 0.0
    %512 = vmatpush1.msra.mxu0 %v486
    %513 = vmatprep.subr.mxu0 0.0
    %514 = vmatpush1.msra.mxu0 %v487
    %515 = vmatprep.subr.mxu0 0.0
    %516 = vmatpush1.msra.mxu0 %v488
    %517 = vmatprep.subr.mxu0 0.0
    %518 = vmatpush1.msra.mxu0 %v489
    %519 = vmatprep.subr.mxu0 0.0
    %520 = vmatpush1.msra.mxu0 %v490
    %521 = vmatprep.subr.mxu0 0.0
    %522 = vmatpush1.msra.mxu0 %v491
    %523 = vmatprep.subr.mxu0 0.0
    %524 = vmatpush1.msra.mxu0 %v492
    %525 = vmatprep.subr.mxu0 0.0
    %526 = vmatpush1.msra.mxu0 %v493
    %527 = vmatprep.subr.mxu0 0.0
    %528 = vmatpush1.msra.mxu0 %v494
    %529 = vmatprep.subr.mxu0 0.0
    %530 = vmatpush1.msra.mxu0 %v495
    %531 = vmatprep.subr.mxu0 0.0
    %532 = vmatpush1.msra.mxu0 %v496
    %533 = vmatprep.subr.mxu0 0.0
    %534 = vmatpush1.msra.mxu0 %v497
    %535 = vmatprep.subr.mxu0 0.0
    %536 = vmatpush1.msra.mxu0 %v498
    %537 = vmatprep.subr.mxu0 0.0
    %538 = vmatpush1.msra.mxu0 %v499
    %539 = vmatprep.subr.mxu0 0.0
    %540 = vmatpush1.msra.mxu0 0.0
    %541 = vmatprep.subr.mxu0 0.0
    %542 = vmatpush1.msra.mxu0 0.0
    %543 = vmatprep.subr.mxu0 0.0
    %544 = vmatpush1.msra.mxu0 0.0
    %545 = vmatprep.subr.mxu0 0.0
    %546 = vmatpush1.msra.mxu0 0.0
    %547 = vmatprep.subr.mxu0 0.0
    %548 = vmatpush1.msra.mxu0 0.0
    %549 = vmatprep.subr.mxu0 0.0
    %550 = vmatpush1.msra.mxu0 0.0
    %551 = vmatprep.subr.mxu0 0.0
    %552 = vmatpush1.msra.mxu0 0.0
    %553 = vmatprep.subr.mxu0 0.0
    %554 = vmatpush1.msra.mxu0 0.0
    %555 = vmatprep.subr.mxu0 0.0
    %556 = vmatpush1.msra.mxu0 0.0
    %557 = vmatprep.subr.mxu0 0.0
    %558 = vmatpush1.msra.mxu0 0.0
    %559 = vmatprep.subr.mxu0 0.0
    %560 = vmatpush1.msra.mxu0 0.0
    %561 = vmatprep.subr.mxu0 0.0
    %562 = vmatpush1.msra.mxu0 0.0
    %563 = vmatprep.subr.mxu0 0.0
    %564 = vmatpush1.msra.mxu0 0.0
    %565 = vmatprep.subr.mxu0 0.0
    %566 = vmatpush1.msra.mxu0 0.0
    %567 = vmatprep.subr.mxu0 0.0
    %568 = vmatpush1.msra.mxu0 0.0
    %569 = vmatprep.subr.mxu0 0.0
    %570 = vmatpush1.msra.mxu0 0.0
    %571 = vmatprep.mubr.f32.mxu0 0.0
    %572 = vmatmul.mubr.f32.gmra.mrb[0].mxu0 %v483
    %v573 = vpop.f32.mrb[0].mxu0
    %v574 = vadd.f32 %v505, %v573
    %v575 = vpop.f32.mrb[0].mxu0
    %576 = vdwg.mxu0
    %v577 = vmul.f32 %v574, 0.1
    %v578 = vmax.f32 %v574, %v577
    %v579 = vld [vmem:[#allocation11] sm:$0xff]
    %v580 = vld [vmem:[#allocation11 + $0x8] sm:$0xff]
    %v581 = vld [vmem:[#allocation11 + $0x10] sm:$0xff]
    %v582 = vld [vmem:[#allocation11 + $0x18] sm:$0xff]
    %v583 = vld [vmem:[#allocation11 + $0x20] sm:$0xff]
    %v584 = vld [vmem:[#allocation11 + $0x28] sm:$0xff]
    %v585 = vld [vmem:[#allocation11 + $0x30] sm:$0xff]
    %v586 = vld [vmem:[#allocation11 + $0x38] sm:$0xff]
    %v587 = vld [vmem:[#allocation11 + $0x40] sm:$0xff]
    %v588 = vld [vmem:[#allocation11 + $0x48] sm:$0xff]
    %v589 = vld [vmem:[#allocation11 + $0x50] sm:$0xff]
    %v590 = vld [vmem:[#allocation11 + $0x58] sm:$0xff]
    %v591 = vld [vmem:[#allocation11 + $0x60] sm:$0xff]
    %v592 = vld [vmem:[#allocation11 + $0x68] sm:$0xff]
    %v593 = vld [vmem:[#allocation11 + $0x70] sm:$0xff]
    %v594 = vld [vmem:[#allocation11 + $0x78] sm:$0xff]
    %v595 = vld [vmem:[%s10] sm:$0x1]
    %v597 = vlaneseq
    %v598 = vshrl.u32 %v597, 7
    %v599 = vsub.s32 0, %v598
    %v600 = vrot.slane %v595, %v599
    %602 = vmatprep.subr.mxu0 0.0
    %603 = vmatpush1.msra.mxu0 %v579
    %604 = vmatprep.subr.mxu0 0.0
    %605 = vmatpush1.msra.mxu0 %v580
    %606 = vmatprep.subr.mxu0 0.0
    %607 = vmatpush1.msra.mxu0 %v581
    %608 = vmatprep.subr.mxu0 0.0
    %609 = vmatpush1.msra.mxu0 %v582
    %610 = vmatprep.subr.mxu0 0.0
    %611 = vmatpush1.msra.mxu0 %v583
    %612 = vmatprep.subr.mxu0 0.0
    %613 = vmatpush1.msra.mxu0 %v584
    %614 = vmatprep.subr.mxu0 0.0
    %615 = vmatpush1.msra.mxu0 %v585
    %616 = vmatprep.subr.mxu0 0.0
    %617 = vmatpush1.msra.mxu0 %v586
    %618 = vmatprep.subr.mxu0 0.0
    %619 = vmatpush1.msra.mxu0 %v587
    %620 = vmatprep.subr.mxu0 0.0
    %621 = vmatpush1.msra.mxu0 %v588
    %622 = vmatprep.subr.mxu0 0.0
    %623 = vmatpush1.msra.mxu0 %v589
    %624 = vmatprep.subr.mxu0 0.0
    %625 = vmatpush1.msra.mxu0 %v590
    %626 = vmatprep.subr.mxu0 0.0
    %627 = vmatpush1.msra.mxu0 %v591
    %628 = vmatprep.subr.mxu0 0.0
    %629 = vmatpush1.msra.mxu0 %v592
    %630 = vmatprep.subr.mxu0 0.0
    %631 = vmatpush1.msra.mxu0 %v593
    %632 = vmatprep.subr.mxu0 0.0
    %633 = vmatpush1.msra.mxu0 %v594
    %634 = vmatprep.subr.mxu0 0.0
    %635 = vmatpush1.msra.mxu0 0.0
    %636 = vmatprep.subr.mxu0 0.0
    %637 = vmatpush1.msra.mxu0 0.0
    %638 = vmatprep.subr.mxu0 0.0
    %639 = vmatpush1.msra.mxu0 0.0
    %640 = vmatprep.subr.mxu0 0.0
    %641 = vmatpush1.msra.mxu0 0.0
    %642 = vmatprep.subr.mxu0 0.0
    %643 = vmatpush1.msra.mxu0 0.0
    %644 = vmatprep.subr.mxu0 0.0
    %645 = vmatpush1.msra.mxu0 0.0
    %646 = vmatprep.subr.mxu0 0.0
    %647 = vmatpush1.msra.mxu0 0.0
    %648 = vmatprep.subr.mxu0 0.0
    %649 = vmatpush1.msra.mxu0 0.0
    %650 = vmatprep.subr.mxu0 0.0
    %651 = vmatpush1.msra.mxu0 0.0
    %652 = vmatprep.subr.mxu0 0.0
    %653 = vmatpush1.msra.mxu0 0.0
    %654 = vmatprep.subr.mxu0 0.0
    %655 = vmatpush1.msra.mxu0 0.0
    %656 = vmatprep.subr.mxu0 0.0
    %657 = vmatpush1.msra.mxu0 0.0
    %658 = vmatprep.subr.mxu0 0.0
    %659 = vmatpush1.msra.mxu0 0.0
    %660 = vmatprep.subr.mxu0 0.0
    %661 = vmatpush1.msra.mxu0 0.0
    %662 = vmatprep.subr.mxu0 0.0
    %663 = vmatpush1.msra.mxu0 0.0
    %664 = vmatprep.subr.mxu0 0.0
    %665 = vmatpush1.msra.mxu0 0.0
    %666 = vmatprep.mubr.f32.mxu0 0.0
    %667 = vmatmul.mubr.f32.gmra.mrb[0].mxu0 %v578
    %v668 = vpop.f32.mrb[0].mxu0
    %v669 = vadd.f32 %v600, %v668
    %v670 = vpop.f32.mrb[0].mxu0
    %671 = vdwg.mxu0
    %v672 = vand.u32 2147483647, %v669
    %v673 = vadd.f32 %v672, 1.0
    %v674 = vrcp.pop %v673
    %v675 = vmul.f32 %v669, %v674
    %v676 = vld [vmem:[%s11] sm:$0x1]
    %v677 = vsub.f32 %v675, %v669
    %v679 = vlaneseq
    %v680 = vshrl.u32 %v679, 7
    %v681 = vsub.s32 0, %v680
    %v682 = vrot.slane %v676, %v681
    %v684 = vmul.f32 %v682, %v677
    %v685 = vadd.f32 %v669, %v684
    %686 = vst [vmem:[#allocation13] sm:$0xff] %v685
    // Predicated region
    $region74: #{tpu_custom_call.1} parent=1 // pred_check
      _
    $region75: #{tpu_custom_call.1} parent=1 // pred_check_branch
      %688 = sbr.rel (0) target = $region77
    $region76: #{tpu_custom_call.1} parent=1 // pred_region
      %s690 = ssub.s32 128, 128
      %691 = vsyncadd [#allocation4], %s690
      %s693 = sshll.u32 [#allocation13], 4
      %s694 = int_to_ptr.vmem [resolvable:$true] %s693
      %696 = dma.vmem_to_hbm [thread:$0]  %s694, 128, %s12, [#allocation4]
    $region77: #{tpu_custom_call.1} parent=1 // pred_fallthru
      _
    // Predicated region
    $region78: #{tpu_custom_call.1} parent=1 // pred_check
      _
    $region79: #{tpu_custom_call.1} parent=1 // pred_check_branch
      %698 = sbr.rel (0) target = $region81
    $region80: #{tpu_custom_call.1} parent=1 // pred_region
      %699 = dma.done [#allocation4], 128
    $region81: #{tpu_custom_call.1} parent=1 // pred_fallthru
      _
    %700 = vsyncpa [#allocation3], 1
    %701 = vsyncpa [#allocation6], 1
    %702 = vsyncpa [#allocation9], 1
    %703 = vsyncpa [#allocation12], 1
    %704 = vsyncpa [#allocation4], 1

</llo_original>
